<compile_context>
chip_gen: v6e
topology: v6e:2x2x1
jax: 0.10.0
libtpu: 0.0.40
codegen_flags: <defaults>
</compile_context>

<pallas_src>
import math

import jax
import jax.numpy as jnp
from jax.experimental import pallas as pl
from jax.experimental.pallas import tpu as pltpu


def _make_pe_add_kernel(batch: int):
    """Kernel: o = x + pe broadcast over batch (x flattened to [rows, batch*d])."""

    def kernel(x_ref, pe_ref, o_ref):
        # x_ref / o_ref: (tile_rows, batch * d_model); pe_ref: (tile_rows, d_model)
        pe = pe_ref[...]
        if batch > 1:
            # Broadcast over batch along the lane axis. Lane-dim concatenate is
            # well supported by Mosaic (same pattern as rotary-embedding kernels)
            # and is pure VPU/XLU filler under the DMA of a memory-bound add.
            pe = jnp.concatenate([pe] * batch, axis=-1)
        o_ref[...] = (x_ref[...] + pe).astype(o_ref.dtype)

    return kernel


def make_positional_encoding(d_model: int, max_len: int = 30) -> jnp.ndarray:
    """Sinusoidal PE buffer, shape [max_len, d_model] (float32)."""
    position = jnp.arange(max_len, dtype=jnp.float32)[:, None]              # [max_len, 1]
    div_term = jnp.exp(
        jnp.arange(0, d_model, 2, dtype=jnp.float32) * (-math.log(10000.0) / d_model)
    )                                                                        # [ceil(d/2)]
    angles = position * div_term                                             # [max_len, ceil(d/2)]
    pe = jnp.zeros((max_len, d_model), dtype=jnp.float32)
    pe = pe.at[:, 0::2].set(jnp.sin(angles))
    pe = pe.at[:, 1::2].set(jnp.cos(angles)[:, : d_model // 2])              # robust to odd d_model
    return pe


def positional_encoding_forward(
    x: jnp.ndarray, pe: jnp.ndarray, *, min_pallas_bytes: int = 256 * 1024
) -> jnp.ndarray:
    """
    Args:
        x:  [seq_len, batch, d_model]
        pe: [max_len, d_model]  (max_len >= seq_len)
        min_pallas_bytes: inputs smaller than this use a plain XLA add
            (Pallas launch + grid overhead dominates at tiny sizes).
    Returns:
        x + pe[:seq_len] broadcast over batch, same shape/dtype as x.
    """
    seq_len, batch, d_model = x.shape
    pe_slice = pe[:seq_len].astype(x.dtype)                                  # [seq, d_model] (thin)

    itemsize = jnp.dtype(x.dtype).itemsize
    x_bytes = x.size * itemsize
    if x_bytes < min_pallas_bytes:
        # Too small for a custom call to pay off; let XLA fuse it.
        return x + pe_slice[:, None, :]

    # Lane-dense 2D layout: last dim = batch * d_model (unmasked vst when it is
    # a multiple of 128; full-dim block is always legal).
    width = batch * d_model
    x2 = x.reshape(seq_len, width)

    # Dtype-aware sublane granularity (sub-32-bit dtypes pack rows per vreg).
    if itemsize >= 4:
        sub = 8
    elif itemsize == 2:
        sub = 16
    else:
        sub = 32

    # Tile rows sized from a VMEM budget: double-buffered (x + out + pe) tiles.
    # ~24 MiB pipelined working set is safe on v5e/v6e/v7x once vmem_limit_bytes
    # is raised explicitly (v7x physical VMEM is 64 MiB per TC).
    x_row_bytes = width * itemsize
    pe_row_bytes = d_model * itemsize
    pipelined_bytes_per_row = 2 * (2 * x_row_bytes + pe_row_bytes)
    vmem_budget = 24 << 20
    tile_rows = max(sub, (vmem_budget // pipelined_bytes_per_row) // sub * sub)

    # v7x megacore: guarantee enough grid steps so each TensorCore gets several
    # pipelined tiles (no effect on single-TC v5e/v6e beyond finer pipelining).
    min_grid_steps = 8
    if seq_len >= min_grid_steps * sub:
        rows_per_step = -(-seq_len // min_grid_steps)        # cdiv
        rows_per_step = -(-rows_per_step // sub) * sub       # round up to sublane granule
        tile_rows = min(tile_rows, rows_per_step)

    if tile_rows >= seq_len:
        tile_rows = seq_len                                  # full-dim block is allowed
    grid = (pl.cdiv(seq_len, tile_rows),)

    pe_bytes = pe_slice.size * itemsize
    out2 = pl.pallas_call(
        _make_pe_add_kernel(batch),
        out_shape=jax.ShapeDtypeStruct((seq_len, width), x.dtype),
        grid=grid,
        in_specs=[
            pl.BlockSpec((tile_rows, width), lambda i: (i, 0)),      # x tile
            pl.BlockSpec((tile_rows, d_model), lambda i: (i, 0)),    # thin pe tile
        ],
        out_specs=pl.BlockSpec((tile_rows, width), lambda i: (i, 0)),
        input_output_aliases={0: 0},                                 # x tile may be reused as output
        compiler_params=pltpu.CompilerParams(
            dimension_semantics=("parallel",),                       # shard tiles across TCs on v7x
            vmem_limit_bytes=32 << 20,
        ),
        cost_estimate=pl.CostEstimate(
            flops=x.size,
            transcendentals=0,
            bytes_accessed=2 * x_bytes + pe_bytes,                   # x read + out write + thin pe read
        ),
    )(x2, pe_slice)

    return out2.reshape(seq_len, batch, d_model)


if __name__ == "__main__":
    key = jax.random.PRNGKey(0)

    # 1) Small shapes consistent with the module: seq=8, batch=2, d_model=32, max_len=30.
    seq_len, batch, d_model, max_len = 8, 2, 32, 30
    x_small = jax.random.normal(key, (seq_len, batch, d_model), dtype=jnp.float32)
    pe_small = make_positional_encoding(d_model, max_len)

    out_small = positional_encoding_forward(x_small, pe_small, min_pallas_bytes=0)  # force Pallas path
    out_small = jax.block_until_ready(out_small)
    ref_small = x_small + pe_small[:seq_len][:, None, :]
    assert out_small.shape == x_small.shape
    assert jnp.allclose(out_small, ref_small, atol=1e-6), "mismatch vs reference (small)"

    # 2) Multi-tile case with a non-divisible seq_len to exercise the pipelined
    #    path and the masked partial-last-tile writeback.
    seq2, batch2, d2 = 300, 2, 128
    x_mid = jax.random.normal(jax.random.PRNGKey(0), (seq2, batch2, d2), dtype=jnp.float32)
    pe_mid = make_positional_encoding(d2, max_len=seq2)

    out_mid = positional_encoding_forward(x_mid, pe_mid, min_pallas_bytes=0)
    out_mid = jax.block_until_ready(out_mid)
    ref_mid = x_mid + pe_mid[:seq2][:, None, :]
    assert jnp.allclose(out_mid, ref_mid, atol=1e-6), "mismatch vs reference (tiled)"

    print("KERNEL_OK")
</pallas_src>

<mosaic_0001>
module attributes {stable_mosaic.version = 11 : i64} {
  func.func @kernel(%arg0: i32, %arg1: memref<8x64xf32, #tpu.memory_space<vmem>>, %arg2: memref<8x32xf32, #tpu.memory_space<vmem>>, %arg3: memref<8x64xf32, #tpu.memory_space<vmem>>) attributes {dimension_semantics = [#tpu.dimension_semantics<parallel>], iteration_bounds = array<i64: 1>, scalar_prefetch = 0 : i64, scratch_operands = 0 : i64, tpu.core_type = #tpu.core_type<tc>, window_params = [{transform_indices = @transform_0, window_bounds = array<i64: 8, 64>}, {transform_indices = @transform_1, window_bounds = array<i64: 8, 32>}, {transform_indices = @transform_2, window_bounds = array<i64: 8, 64>}]} {
    %c0 = arith.constant 0 : index
    %c0_0 = arith.constant 0 : index
    %0 = vector.load %arg2[%c0, %c0_0] : memref<8x32xf32, #tpu.memory_space<vmem>>, vector<8x32xf32>
    %1 = tpu.concatenate %0, %0 in 1 : vector<8x32xf32>, vector<8x32xf32> -> vector<8x64xf32>
    %c0_1 = arith.constant 0 : index
    %c0_2 = arith.constant 0 : index
    %2 = vector.load %arg1[%c0_1, %c0_2] : memref<8x64xf32, #tpu.memory_space<vmem>>, vector<8x64xf32>
    %3 = arith.addf %2, %1 : vector<8x64xf32>
    %c0_3 = arith.constant 0 : index
    %c0_4 = arith.constant 0 : index
    %4 = vector.load %arg3[%c0_3, %c0_4] : memref<8x64xf32, #tpu.memory_space<vmem>>, vector<8x64xf32>
    tpu.vector_store %arg3[%c0_3, %c0_4], %3 {strides = array<i32>} : memref<8x64xf32, #tpu.memory_space<vmem>>, vector<8x64xf32>,
    return
  }
  func.func @transform_0(%arg0: i32) -> (i32, i32) {
    %c0_i32 = arith.constant 0 : i32
    %c0_i32_0 = arith.constant 0 : i32
    return %arg0, %c0_i32 : i32, i32
  }
  func.func @transform_1(%arg0: i32) -> (i32, i32) {
    %c0_i32 = arith.constant 0 : i32
    %c0_i32_0 = arith.constant 0 : i32
    return %arg0, %c0_i32 : i32, i32
  }
  func.func @transform_2(%arg0: i32) -> (i32, i32) {
    %c0_i32 = arith.constant 0 : i32
    %c0_i32_0 = arith.constant 0 : i32
    return %arg0, %c0_i32 : i32, i32
  }
}

</mosaic_0001>

<llo_original>
// kernel: tpu_custom_call.1
$region0: #{tpu_custom_call.1}
  #allocation0 [shape = 'u32[]', space=smem, size = 0x4, offset = 0x4, fixed_abs, tag = 'smem constant byte address 0x4 - core index']
  #allocation1 [shape = 'u32[144,128]{1,0:T(1,128)}', space=vmem, size = 0x12000, scoped, tag = 'internal scratch']
  %s0 = inlined_call_operand.hbm [shape: f32[8,64], index: 0, kind: input, shape index: {}, may-alias: {0,2}]
  %s1 = inlined_call_operand.vmem [shape: f32[8,32], index: 1, kind: input, shape index: {}]
  %s2 = inlined_call_operand.hbm [shape: f32[8,64], index: 2, kind: output, shape index: {}, may-alias: {0,2}]
  %s3 = sld [smem:[#allocation0]]
  $region22: #{tpu_custom_call.1} parent=0
    _
  %s5 = ssub.s32 1, %s3
  %s6 = scalar_select 0, %s5, %s3
  $region1: #{tpu_custom_call.1} parent=0
    #allocation2 [shape = 'u8[4096]{0}', space=vmem, size = 0x1000, scoped, tag = 'input window, operand 0, single buffered']
    #allocation3 [shape = 's32[1]{0}', space=sflag, size = 0x4, scoped, tag = 'scoped memory for tpu_custom_call.1']
    #allocation4 [shape = 's32[1]{0}', space=sflag, size = 0x4, scoped, tag = 'scoped memory for tpu_custom_call.1']
    #allocation5 [shape = 'u8[4096]{0}', space=vmem, size = 0x1000, scoped, tag = 'output window, operand 0, single buffered']
    %7 = vsyncpa [#allocation3], 0
    %8 = vsyncpa [#allocation4], 0
    // Predicated region
    $region2: #{tpu_custom_call.1} parent=1 // pred_check
      _
    $region3: #{tpu_custom_call.1} parent=1 // pred_check_branch
      %10 = sbr.rel (0) target = $region5
    $region4: #{tpu_custom_call.1} parent=1 // pred_region
      %s12 = ssub.s32 128, 128
      %13 = vsyncadd [#allocation3], %s12
      %s15 = sshll.u32 [#allocation2], 4
      %s16 = int_to_ptr.vmem [resolvable:$true] %s15
      %18 = dma.hbm_to_vmem [thread:$0]  %s0, 128, %s16, [#allocation3]
    $region5: #{tpu_custom_call.1} parent=1 // pred_fallthru
      _
    // Predicated region
    $region6: #{tpu_custom_call.1} parent=1 // pred_check
      _
    $region7: #{tpu_custom_call.1} parent=1 // pred_check_branch
      %20 = sbr.rel (0) target = $region9
    $region8: #{tpu_custom_call.1} parent=1 // pred_region
      _
    $region9: #{tpu_custom_call.1} parent=1 // pred_fallthru
      _
    // Predicated region
    $region10: #{tpu_custom_call.1} parent=1 // pred_check
      _
    $region11: #{tpu_custom_call.1} parent=1 // pred_check_branch
      %22 = sbr.rel (0) target = $region13
    $region12: #{tpu_custom_call.1} parent=1 // pred_region
      %23 = dma.done [#allocation3], 128
    $region13: #{tpu_custom_call.1} parent=1 // pred_fallthru
      _
    %v24 = vld [vmem:[%s1] sm:$0xff]
    %26 = vrot.lane.b32.xlu0 %v24, 32
    %v27 = vpop.permute.xlu0 %26
    %vm29 = vcmask 261120
    %v30 = vsel %vm29, %v24, %v27
    %v31 = vld [vmem:[#allocation2] sm:$0xff]
    %v32 = vadd.f32 %v31, %v30
    %vm33 = vcmask 523264
    %34 = vst.msk [vmem:[#allocation5] sm:$0xff] %vm33, %v32
    // Predicated region
    $region14: #{tpu_custom_call.1} parent=1 // pred_check
      _
    $region15: #{tpu_custom_call.1} parent=1 // pred_check_branch
      %36 = sbr.rel (0) target = $region17
    $region16: #{tpu_custom_call.1} parent=1 // pred_region
      %s38 = ssub.s32 128, 128
      %39 = vsyncadd [#allocation4], %s38
      %s41 = sshll.u32 [#allocation5], 4
      %s42 = int_to_ptr.vmem [resolvable:$true] %s41
      %44 = dma.vmem_to_hbm [thread:$0]  %s42, 128, %s2, [#allocation4]
    $region17: #{tpu_custom_call.1} parent=1 // pred_fallthru
      _
    // Predicated region
    $region18: #{tpu_custom_call.1} parent=1 // pred_check
      _
    $region19: #{tpu_custom_call.1} parent=1 // pred_check_branch
      %46 = sbr.rel (0) target = $region21
    $region20: #{tpu_custom_call.1} parent=1 // pred_region
      %47 = dma.done [#allocation4], 128
    $region21: #{tpu_custom_call.1} parent=1 // pred_fallthru
      _
    %48 = vsyncpa [#allocation3], 1
    %49 = vsyncpa [#allocation4], 1

</llo_original>
